<compile_context>
chip_gen: v7x
topology: tpu7x:2x2x1
jax: 0.10.0
libtpu: 0.0.40
codegen_flags: <defaults>
</compile_context>

<pallas_src>
import functools

import jax
import jax.numpy as jnp
from jax.experimental import pallas as pl
from jax.experimental.pallas import tpu as pltpu

LANES = 128     # TPU lane width
QMAX = 255.0    # 8-bit quantization


def _pick_group(n_images, per_image_bytes, budget_bytes=4 << 20):
    """Largest divisor g of n_images whose per-step block footprint fits the budget."""
    for g in range(n_images, 0, -1):
        if n_images % g == 0 and g * per_image_bytes <= budget_bytes:
            return g
    return 1


def _make_capture_kernel(g, with_rmap, with_stats):
    """Simulated LDR capture + QuantizeSTE.forward(n=8) for g images per grid step.

      phi         = clip(hdr * exposure, 0, 1)      # ImageFormation stand-in
      q           = round(phi * 255)                # exact integer levels in f32
      ldr   (out) = q / 255                         # QuantizeSTE forward
      rmap  (out) = phi                             # ldr_denom stand-in
      stats (out) = per-lane counts of q==0 / q==255 (what the controller consumes)
    """
    def kernel(hdr_ref, exp_ref, *out_refs):
        refs = list(out_refs)
        ldr_ref = refs.pop(0)
        rmap_ref = refs.pop(0) if with_rmap else None
        stats_ref = refs.pop(0) if with_stats else None

        base = pl.program_id(0) * g
        for j in range(g):                             # g is small & static
            e = exp_ref[base + j]                      # scalar f32 from SMEM
            phi = jnp.clip(hdr_ref[j] * e, 0.0, 1.0)   # (rows, 128)
            q = jnp.round(phi * QMAX)                  # phi in [0,1] -> no 2nd clip
            ldr_ref[j] = q * (1.0 / QMAX)
            if with_rmap:
                rmap_ref[j] = phi
            if with_stats:
                # TODO(synk): calculate_histogram_global source not provided; the
                # controller stand-in only reads the dark (bin 0) and saturated
                # (bin 255) fractions, so the 256-bin histogram is reduced to two
                # per-lane counts (VPU-only; the final 128-lane sum runs in JAX).
                dark = jnp.sum((q == 0.0).astype(jnp.float32), axis=0, keepdims=True)
                sat = jnp.sum((q == QMAX).astype(jnp.float32), axis=0, keepdims=True)
                stats_ref[j] = jnp.concatenate([dark, sat], axis=0)   # (2, 128)
    return kernel


def capture_quantize(hdr_stack, exposure, *, n_images, image_offset=0,
                     with_rmap=False, with_stats=False,
                     vmem_budget_bytes=4 << 20):
    """Run the fused capture kernel over hdr_stack[image_offset : image_offset + n_images].

    hdr_stack: (G_total, rows, 128) f32; exposure: (n_images,) f32 (one per image)."""
    _, rows, lanes = hdr_stack.shape
    n_img_arrays = 2 + (1 if with_rmap else 0)              # image-sized in + outs
    per_image_bytes = n_img_arrays * rows * lanes * 4 * 2   # x2: double-buffered
    g = _pick_group(n_images, per_image_bytes, vmem_budget_bytes)
    assert image_offset % g == 0
    off = image_offset // g

    img_in_spec = pl.BlockSpec((g, rows, lanes), lambda i, off=off: (i + off, 0, 0))
    img_out_spec = pl.BlockSpec((g, rows, lanes), lambda i: (i, 0, 0))

    out_shapes = [jax.ShapeDtypeStruct((n_images, rows, lanes), jnp.float32)]
    out_specs = [img_out_spec]
    if with_rmap:
        out_shapes.append(jax.ShapeDtypeStruct((n_images, rows, lanes), jnp.float32))
        out_specs.append(img_out_spec)
    if with_stats:
        out_shapes.append(jax.ShapeDtypeStruct((n_images, 2, lanes), jnp.float32))
        out_specs.append(pl.BlockSpec((g, 2, lanes), lambda i: (i, 0, 0)))

    outs = pl.pallas_call(
        _make_capture_kernel(g, with_rmap, with_stats),
        out_shape=tuple(out_shapes),
        grid=(n_images // g,),
        in_specs=[img_in_spec,
                  pl.BlockSpec(memory_space=pltpu.MemorySpace.SMEM)],
        out_specs=tuple(out_specs),
        compiler_params=pltpu.CompilerParams(dimension_semantics=("parallel",)),
    )(hdr_stack.astype(jnp.float32), exposure.astype(jnp.float32))
    if not isinstance(outs, (tuple, list)):
        outs = (outs,)
    return tuple(outs)


# -----------------------------------------------------------------------------
# Glue (plain JAX): exposure controller.
# TODO(synk): stereo_exposure_control source not provided; deterministic
# saturation/shadow-balancing stand-in preserving shapes.  It only consumes the
# dark / saturated pixel fractions, matching the shrunk in-kernel stats.
# -----------------------------------------------------------------------------
def stereo_exposure_control(exp_high, exp_low, counts1, counts2, alpha1, alpha2,
                            total_pixels, exp_gap_threshold=2.0):
    dark1, sat1 = counts1[:, 0] / total_pixels, counts1[:, 1] / total_pixels
    dark2, sat2 = counts2[:, 0] / total_pixels, counts2[:, 1] / total_pixels
    exp1 = exp_high * (1.0 + alpha1 * (dark1 - sat1))
    exp2 = exp_low * (1.0 + alpha2 * (dark2 - sat2))
    exp1 = jnp.minimum(exp1, exp2 * exp_gap_threshold)
    exp1 = jnp.maximum(exp1, exp2)
    return exp1, exp2


# -----------------------------------------------------------------------------
# CombineModel.forward equivalent
# -----------------------------------------------------------------------------
def combine_model_forward(left_hdr, right_hdr, left_next_hdr, right_next_hdr,
                          initial_exp_high, initial_exp_low, alpha_values,
                          test_mode=False, fixed_range_middle=None):
    B, C, H, W = left_hdr.shape
    N = C * H * W
    assert N % LANES == 0, "C*H*W must be a multiple of 128 for the lane-dense view"
    rows = N // LANES

    def to_tiles(x):                       # (B,C,H,W) -> (B, rows, 128) f32
        return x.reshape(B, rows, LANES).astype(jnp.float32)

    def unflat(x):                         # (B, rows, 128) -> (B,C,H,W)
        return x.reshape(-1, C, H, W)

    l_t = to_tiles(left_hdr)
    # Single 4-image-per-batch stack, [left, left_next, right, right_next] order.
    hdr_stack = jnp.concatenate(
        [l_t, to_tiles(left_next_hdr), to_tiles(right_hdr), to_tiles(right_next_hdr)],
        axis=0)                            # (4B, rows, 128)

    # TODO(synk): ImageFormation source not provided; stand-in models LDR capture
    # as clip(hdr * exposure, 0, 1) with deterministic (noise-free)
    # noise_modeling(), ldr_denom == phi, and range_middle as the per-image mean
    # of the exposed radiance.
    if test_mode and fixed_range_middle is None:
        fixed_range_middle = jnp.mean(
            l_t * initial_exp_high.reshape(B, 1, 1).astype(jnp.float32),
            axis=(1, 2)).reshape(-1)

    # ---- Phase 1: fused initial capture + quantize + dark/sat stats over the
    # first 2B stack entries.  (The right-camera initial captures of the
    # reference forward are never consumed downstream, so they are skipped.)
    exp_init = jnp.concatenate([initial_exp_high, initial_exp_low]).astype(jnp.float32)
    ldr_a, stats_a = capture_quantize(hdr_stack, exp_init,
                                      n_images=2 * B, with_stats=True)
    counts = jnp.sum(stats_a, axis=-1)     # (2B, 2): [dark, saturated] per image

    ldr_left_exph_cap = ldr_a[:B]
    ldr_left_expl_cap = ldr_a[B:2 * B]

    exp1, exp2 = stereo_exposure_control(initial_exp_high, initial_exp_low,
                                         counts[:B], counts[B:2 * B],
                                         alpha1=alpha_values, alpha2=alpha_values,
                                         total_pixels=float(N),
                                         exp_gap_threshold=2.0)

    # ---- Phase 2: re-capture with adjusted exposures.
    exp_adj = jnp.concatenate([exp1, exp2]).astype(jnp.float32)   # shared L/R order
    # 2a: left pair (needs the radiance map rmap = phi).
    ldr_left, rmap_left = capture_quantize(hdr_stack, exp_adj,
                                           n_images=2 * B, image_offset=0,
                                           with_rmap=True)
    # 2b: right pair, ldr only (no dead rmap block allocation/writeback).
    (ldr_right,) = capture_quantize(hdr_stack, exp_adj,
                                    n_images=2 * B, image_offset=2 * B)

    left_ldr_adj_exph = ldr_left[:B]
    left_ldr_adj_expl = ldr_left[B:2 * B]
    right_ldr_adj_exph = ldr_right[:B]
    right_ldr_adj_expl = ldr_right[B:2 * B]
    rmap_ldr1 = rmap_left[:B]
    rmap_ldr2 = rmap_left[B:2 * B]

    # TODO(synk): RAFTStereoFusion_refine (disparity network) source not provided;
    # returning empty placeholders for its outputs.
    disp_predictions, fmap_list, mask_list, flow_L = [], [], [], None

    original_img_list = [left_hdr, left_next_hdr, unflat(rmap_ldr1), unflat(rmap_ldr2)]
    captured_rand_img_list = [unflat(ldr_left_exph_cap), unflat(ldr_left_expl_cap)]
    captured_adj_img_list = [unflat(left_ldr_adj_exph), unflat(left_ldr_adj_expl),
                             unflat(right_ldr_adj_exph), unflat(right_ldr_adj_expl)]

    return (disp_predictions, original_img_list, captured_rand_img_list,
            captured_adj_img_list, exp1, exp2, fmap_list, mask_list, flow_L,
            fixed_range_middle)


if __name__ == "__main__":
    key = jax.random.PRNGKey(0)
    B, C, H, W = 2, 3, 16, 16
    k1, k2, k3, k4 = jax.random.split(key, 4)

    left_hdr = jax.random.uniform(k1, (B, C, H, W), jnp.float32) * 4.0
    right_hdr = jax.random.uniform(k2, (B, C, H, W), jnp.float32) * 4.0
    left_next_hdr = jax.random.uniform(k3, (B, C, H, W), jnp.float32) * 4.0
    right_next_hdr = jax.random.uniform(k4, (B, C, H, W), jnp.float32) * 4.0

    # deterministic "parameters" implied by the module __init__
    initial_exp_high = jnp.full((B,), 1.5, jnp.float32)
    initial_exp_low = jnp.full((B,), 0.25, jnp.float32)
    alpha_values = jnp.full((B,), 0.1, jnp.float32)   # self.alpha_values

    fwd = jax.jit(functools.partial(combine_model_forward, test_mode=True))
    out = fwd(left_hdr, right_hdr, left_next_hdr, right_next_hdr,
              initial_exp_high, initial_exp_low, alpha_values)
    jax.block_until_ready(out)

    (disp_predictions, original_img_list, captured_rand_img_list,
     captured_adj_img_list, exp1, exp2, fmap_list, mask_list, flow_L,
     fixed_range_middle) = out

    def ref_capture(hdr, exp):
        phi = jnp.clip(hdr * exp.reshape(-1, 1, 1, 1), 0.0, 1.0)
        q = jnp.round(phi * 255.0)
        return q / 255.0, phi, q

    # sanity 1: phase-1 captures (quantized LDR) match a plain-JAX reference
    ldr_exph_ref, _, q_exph = ref_capture(left_hdr, initial_exp_high)
    ldr_expl_ref, _, q_expl = ref_capture(left_next_hdr, initial_exp_low)
    assert bool(jnp.allclose(captured_rand_img_list[0], ldr_exph_ref, atol=1e-6))
    assert bool(jnp.allclose(captured_rand_img_list[1], ldr_expl_ref, atol=1e-6))

    # sanity 2: in-kernel dark/saturated counts match a plain-JAX reference
    rows = (C * H * W) // LANES
    hdr_stack = jnp.concatenate(
        [x.reshape(B, rows, LANES) for x in
         (left_hdr, left_next_hdr, right_hdr, right_next_hdr)], axis=0)
    exp_init = jnp.concatenate([initial_exp_high, initial_exp_low])
    _, stats = capture_quantize(hdr_stack, exp_init, n_images=2 * B, with_stats=True)
    counts = jnp.sum(stats, axis=-1)
    q_stack = jnp.concatenate([q_exph, q_expl], axis=0).reshape(2 * B, -1)
    dark_ref = jnp.sum(q_stack == 0.0, axis=1).astype(jnp.float32)
    sat_ref = jnp.sum(q_stack == 255.0, axis=1).astype(jnp.float32)
    assert bool(jnp.allclose(counts[:, 0], dark_ref))
    assert bool(jnp.allclose(counts[:, 1], sat_ref))

    # sanity 3: phase-2 adjusted captures + radiance maps match plain JAX using
    # the controller-produced exposures (exercises the offset index_map too)
    ldr_l_adj_ref, phi_l_ref, _ = ref_capture(left_hdr, exp1)
    ldr_rn_adj_ref, _, _ = ref_capture(right_next_hdr, exp2)
    assert bool(jnp.allclose(captured_adj_img_list[0], ldr_l_adj_ref, atol=1e-6))
    assert bool(jnp.allclose(captured_adj_img_list[3], ldr_rn_adj_ref, atol=1e-6))
    assert bool(jnp.allclose(original_img_list[2], phi_l_ref, atol=1e-6))

    # sanity 4: quantized outputs are exact multiples of 1/255 in [0, 1]
    ldr = captured_adj_img_list[0]
    assert ldr.shape == (B, C, H, W)
    assert bool(jnp.all((ldr >= 0.0) & (ldr <= 1.0)))
    assert bool(jnp.allclose(jnp.round(ldr * 255.0) / 255.0, ldr, atol=1e-6))

    print("KERNEL_OK")
</pallas_src>

<mosaic_0001>
module attributes {stable_mosaic.version = 11 : i64} {
  func.func @kernel(%arg0: i32, %arg1: memref<4x6x128xf32, #tpu.memory_space<vmem>>, %arg2: memref<4xf32, #tpu.memory_space<smem>>, %arg3: memref<4x6x128xf32, #tpu.memory_space<vmem>>, %arg4: memref<4x6x128xf32, #tpu.memory_space<vmem>>) attributes {dimension_semantics = [#tpu.dimension_semantics<parallel>], iteration_bounds = array<i64: 1>, scalar_prefetch = 0 : i64, scratch_operands = 0 : i64, tpu.core_type = #tpu.core_type<tc>, window_params = [{transform_indices = @transform_0, window_bounds = array<i64: 4, 6, 128>}, {transform_indices = @transform_1, window_bounds = array<i64: 4>}, {transform_indices = @transform_2, window_bounds = array<i64: 4, 6, 128>}, {transform_indices = @transform_3, window_bounds = array<i64: 4, 6, 128>}]} {
    %c4_i32 = arith.constant 4 : i32
    %0 = arith.muli %arg0, %c4_i32 : i32
    %c0_i32 = arith.constant 0 : i32
    %1 = arith.addi %0, %c0_i32 : i32
    %2 = arith.index_cast %1 : i32 to index
    %3 = memref.load %arg2[%2] : memref<4xf32, #tpu.memory_space<smem>>
    %c0 = arith.constant 0 : index
    %c0_0 = arith.constant 0 : index
    %c0_1 = arith.constant 0 : index
    %4 = vector.load %arg1[%c0, %c0_0, %c0_1] : memref<4x6x128xf32, #tpu.memory_space<vmem>>, vector<1x6x128xf32>
    %5 = vector.shape_cast %4 : vector<1x6x128xf32> to vector<6x128xf32>
    %6 = vector.broadcast %3 : f32 to vector<6x128xf32>
    %7 = arith.mulf %5, %6 : vector<6x128xf32>
    %cst = arith.constant 0.000000e+00 : f32
    %cst_2 = arith.constant 1.000000e+00 : f32
    %8 = vector.broadcast %cst : f32 to vector<6x128xf32>
    %9 = arith.maximumf %8, %7 : vector<6x128xf32>
    %10 = vector.broadcast %cst_2 : f32 to vector<6x128xf32>
    %11 = arith.minimumf %10, %9 : vector<6x128xf32>
    %cst_3 = arith.constant 2.550000e+02 : f32
    %12 = vector.broadcast %cst_3 : f32 to vector<6x128xf32>
    %13 = arith.mulf %11, %12 : vector<6x128xf32>
    %14 = math.roundeven %13 : vector<6x128xf32>
    %cst_4 = arith.constant 0.00392156886 : f32
    %15 = vector.broadcast %cst_4 : f32 to vector<6x128xf32>
    %16 = arith.mulf %14, %15 : vector<6x128xf32>
    %c0_5 = arith.constant 0 : index
    %c0_6 = arith.constant 0 : index
    %c0_7 = arith.constant 0 : index
    %17 = vector.load %arg3[%c0_5, %c0_6, %c0_7] : memref<4x6x128xf32, #tpu.memory_space<vmem>>, vector<1x6x128xf32>
    %18 = vector.shape_cast %17 : vector<1x6x128xf32> to vector<6x128xf32>
    %19 = vector.shape_cast %16 : vector<6x128xf32> to vector<1x6x128xf32>
    tpu.vector_store %arg3[%c0_5, %c0_6, %c0_7], %19 {strides = array<i32>} : memref<4x6x128xf32, #tpu.memory_space<vmem>>, vector<1x6x128xf32>,
    %c0_8 = arith.constant 0 : index
    %c0_9 = arith.constant 0 : index
    %c0_10 = arith.constant 0 : index
    %20 = vector.load %arg4[%c0_8, %c0_9, %c0_10] : memref<4x6x128xf32, #tpu.memory_space<vmem>>, vector<1x6x128xf32>
    %21 = vector.shape_cast %20 : vector<1x6x128xf32> to vector<6x128xf32>
    %22 = vector.shape_cast %11 : vector<6x128xf32> to vector<1x6x128xf32>
    tpu.vector_store %arg4[%c0_8, %c0_9, %c0_10], %22 {strides = array<i32>} : memref<4x6x128xf32, #tpu.memory_space<vmem>>, vector<1x6x128xf32>,
    %c1_i32 = arith.constant 1 : i32
    %23 = arith.addi %0, %c1_i32 : i32
    %24 = arith.index_cast %23 : i32 to index
    %25 = memref.load %arg2[%24] : memref<4xf32, #tpu.memory_space<smem>>
    %c1 = arith.constant 1 : index
    %c0_11 = arith.constant 0 : index
    %c0_12 = arith.constant 0 : index
    %26 = vector.load %arg1[%c1, %c0_11, %c0_12] : memref<4x6x128xf32, #tpu.memory_space<vmem>>, vector<1x6x128xf32>
    %27 = vector.shape_cast %26 : vector<1x6x128xf32> to vector<6x128xf32>
    %28 = vector.broadcast %25 : f32 to vector<6x128xf32>
    %29 = arith.mulf %27, %28 : vector<6x128xf32>
    %cst_13 = arith.constant 0.000000e+00 : f32
    %cst_14 = arith.constant 1.000000e+00 : f32
    %30 = vector.broadcast %cst_13 : f32 to vector<6x128xf32>
    %31 = arith.maximumf %30, %29 : vector<6x128xf32>
    %32 = vector.broadcast %cst_14 : f32 to vector<6x128xf32>
    %33 = arith.minimumf %32, %31 : vector<6x128xf32>
    %cst_15 = arith.constant 2.550000e+02 : f32
    %34 = vector.broadcast %cst_15 : f32 to vector<6x128xf32>
    %35 = arith.mulf %33, %34 : vector<6x128xf32>
    %36 = math.roundeven %35 : vector<6x128xf32>
    %cst_16 = arith.constant 0.00392156886 : f32
    %37 = vector.broadcast %cst_16 : f32 to vector<6x128xf32>
    %38 = arith.mulf %36, %37 : vector<6x128xf32>
    %c1_17 = arith.constant 1 : index
    %c0_18 = arith.constant 0 : index
    %c0_19 = arith.constant 0 : index
    %39 = vector.load %arg3[%c1_17, %c0_18, %c0_19] : memref<4x6x128xf32, #tpu.memory_space<vmem>>, vector<1x6x128xf32>
    %40 = vector.shape_cast %39 : vector<1x6x128xf32> to vector<6x128xf32>
    %41 = vector.shape_cast %38 : vector<6x128xf32> to vector<1x6x128xf32>
    tpu.vector_store %arg3[%c1_17, %c0_18, %c0_19], %41 {strides = array<i32>} : memref<4x6x128xf32, #tpu.memory_space<vmem>>, vector<1x6x128xf32>,
    %c1_20 = arith.constant 1 : index
    %c0_21 = arith.constant 0 : index
    %c0_22 = arith.constant 0 : index
    %42 = vector.load %arg4[%c1_20, %c0_21, %c0_22] : memref<4x6x128xf32, #tpu.memory_space<vmem>>, vector<1x6x128xf32>
    %43 = vector.shape_cast %42 : vector<1x6x128xf32> to vector<6x128xf32>
    %44 = vector.shape_cast %33 : vector<6x128xf32> to vector<1x6x128xf32>
    tpu.vector_store %arg4[%c1_20, %c0_21, %c0_22], %44 {strides = array<i32>} : memref<4x6x128xf32, #tpu.memory_space<vmem>>, vector<1x6x128xf32>,
    %c2_i32 = arith.constant 2 : i32
    %45 = arith.addi %0, %c2_i32 : i32
    %46 = arith.index_cast %45 : i32 to index
    %47 = memref.load %arg2[%46] : memref<4xf32, #tpu.memory_space<smem>>
    %c2 = arith.constant 2 : index
    %c0_23 = arith.constant 0 : index
    %c0_24 = arith.constant 0 : index
    %48 = vector.load %arg1[%c2, %c0_23, %c0_24] : memref<4x6x128xf32, #tpu.memory_space<vmem>>, vector<1x6x128xf32>
    %49 = vector.shape_cast %48 : vector<1x6x128xf32> to vector<6x128xf32>
    %50 = vector.broadcast %47 : f32 to vector<6x128xf32>
    %51 = arith.mulf %49, %50 : vector<6x128xf32>
    %cst_25 = arith.constant 0.000000e+00 : f32
    %cst_26 = arith.constant 1.000000e+00 : f32
    %52 = vector.broadcast %cst_25 : f32 to vector<6x128xf32>
    %53 = arith.maximumf %52, %51 : vector<6x128xf32>
    %54 = vector.broadcast %cst_26 : f32 to vector<6x128xf32>
    %55 = arith.minimumf %54, %53 : vector<6x128xf32>
    %cst_27 = arith.constant 2.550000e+02 : f32
    %56 = vector.broadcast %cst_27 : f32 to vector<6x128xf32>
    %57 = arith.mulf %55, %56 : vector<6x128xf32>
    %58 = math.roundeven %57 : vector<6x128xf32>
    %cst_28 = arith.constant 0.00392156886 : f32
    %59 = vector.broadcast %cst_28 : f32 to vector<6x128xf32>
    %60 = arith.mulf %58, %59 : vector<6x128xf32>
    %c2_29 = arith.constant 2 : index
    %c0_30 = arith.constant 0 : index
    %c0_31 = arith.constant 0 : index
    %61 = vector.load %arg3[%c2_29, %c0_30, %c0_31] : memref<4x6x128xf32, #tpu.memory_space<vmem>>, vector<1x6x128xf32>
    %62 = vector.shape_cast %61 : vector<1x6x128xf32> to vector<6x128xf32>
    %63 = vector.shape_cast %60 : vector<6x128xf32> to vector<1x6x128xf32>
    tpu.vector_store %arg3[%c2_29, %c0_30, %c0_31], %63 {strides = array<i32>} : memref<4x6x128xf32, #tpu.memory_space<vmem>>, vector<1x6x128xf32>,
    %c2_32 = arith.constant 2 : index
    %c0_33 = arith.constant 0 : index
    %c0_34 = arith.constant 0 : index
    %64 = vector.load %arg4[%c2_32, %c0_33, %c0_34] : memref<4x6x128xf32, #tpu.memory_space<vmem>>, vector<1x6x128xf32>
    %65 = vector.shape_cast %64 : vector<1x6x128xf32> to vector<6x128xf32>
    %66 = vector.shape_cast %55 : vector<6x128xf32> to vector<1x6x128xf32>
    tpu.vector_store %arg4[%c2_32, %c0_33, %c0_34], %66 {strides = array<i32>} : memref<4x6x128xf32, #tpu.memory_space<vmem>>, vector<1x6x128xf32>,
    %c3_i32 = arith.constant 3 : i32
    %67 = arith.addi %0, %c3_i32 : i32
    %68 = arith.index_cast %67 : i32 to index
    %69 = memref.load %arg2[%68] : memref<4xf32, #tpu.memory_space<smem>>
    %c3 = arith.constant 3 : index
    %c0_35 = arith.constant 0 : index
    %c0_36 = arith.constant 0 : index
    %70 = vector.load %arg1[%c3, %c0_35, %c0_36] : memref<4x6x128xf32, #tpu.memory_space<vmem>>, vector<1x6x128xf32>
    %71 = vector.shape_cast %70 : vector<1x6x128xf32> to vector<6x128xf32>
    %72 = vector.broadcast %69 : f32 to vector<6x128xf32>
    %73 = arith.mulf %71, %72 : vector<6x128xf32>
    %cst_37 = arith.constant 0.000000e+00 : f32
    %cst_38 = arith.constant 1.000000e+00 : f32
    %74 = vector.broadcast %cst_37 : f32 to vector<6x128xf32>
    %75 = arith.maximumf %74, %73 : vector<6x128xf32>
    %76 = vector.broadcast %cst_38 : f32 to vector<6x128xf32>
    %77 = arith.minimumf %76, %75 : vector<6x128xf32>
    %cst_39 = arith.constant 2.550000e+02 : f32
    %78 = vector.broadcast %cst_39 : f32 to vector<6x128xf32>
    %79 = arith.mulf %77, %78 : vector<6x128xf32>
    %80 = math.roundeven %79 : vector<6x128xf32>
    %cst_40 = arith.constant 0.00392156886 : f32
    %81 = vector.broadcast %cst_40 : f32 to vector<6x128xf32>
    %82 = arith.mulf %80, %81 : vector<6x128xf32>
    %c3_41 = arith.constant 3 : index
    %c0_42 = arith.constant 0 : index
    %c0_43 = arith.constant 0 : index
    %83 = vector.load %arg3[%c3_41, %c0_42, %c0_43] : memref<4x6x128xf32, #tpu.memory_space<vmem>>, vector<1x6x128xf32>
    %84 = vector.shape_cast %83 : vector<1x6x128xf32> to vector<6x128xf32>
    %85 = vector.shape_cast %82 : vector<6x128xf32> to vector<1x6x128xf32>
    tpu.vector_store %arg3[%c3_41, %c0_42, %c0_43], %85 {strides = array<i32>} : memref<4x6x128xf32, #tpu.memory_space<vmem>>, vector<1x6x128xf32>,
    %c3_44 = arith.constant 3 : index
    %c0_45 = arith.constant 0 : index
    %c0_46 = arith.constant 0 : index
    %86 = vector.load %arg4[%c3_44, %c0_45, %c0_46] : memref<4x6x128xf32, #tpu.memory_space<vmem>>, vector<1x6x128xf32>
    %87 = vector.shape_cast %86 : vector<1x6x128xf32> to vector<6x128xf32>
    %88 = vector.shape_cast %77 : vector<6x128xf32> to vector<1x6x128xf32>
    tpu.vector_store %arg4[%c3_44, %c0_45, %c0_46], %88 {strides = array<i32>} : memref<4x6x128xf32, #tpu.memory_space<vmem>>, vector<1x6x128xf32>,
    return
  }
  func.func @transform_0(%arg0: i32) -> (i32, i32, i32) {
    %c0_i32 = arith.constant 0 : i32
    %0 = arith.addi %arg0, %c0_i32 : i32
    %c0_i32_0 = arith.constant 0 : i32
    %c0_i32_1 = arith.constant 0 : i32
    %c0_i32_2 = arith.constant 0 : i32
    return %0, %c0_i32_0, %c0_i32_1 : i32, i32, i32
  }
  func.func @transform_1(%arg0: i32) -> i32 {
    %c0_i32 = arith.constant 0 : i32
    %c0_i32_0 = arith.constant 0 : i32
    return %c0_i32 : i32
  }
  func.func @transform_2(%arg0: i32) -> (i32, i32, i32) {
    %c0_i32 = arith.constant 0 : i32
    %c0_i32_0 = arith.constant 0 : i32
    %c0_i32_1 = arith.constant 0 : i32
    return %arg0, %c0_i32, %c0_i32_0 : i32, i32, i32
  }
  func.func @transform_3(%arg0: i32) -> (i32, i32, i32) {
    %c0_i32 = arith.constant 0 : i32
    %c0_i32_0 = arith.constant 0 : i32
    %c0_i32_1 = arith.constant 0 : i32
    return %arg0, %c0_i32, %c0_i32_0 : i32, i32, i32
  }
}

module attributes {stable_mosaic.version = 11 : i64} {
  func.func @kernel(%arg0: i32, %arg1: memref<4x6x128xf32, #tpu.memory_space<vmem>>, %arg2: memref<4xf32, #tpu.memory_space<smem>>, %arg3: memref<4x6x128xf32, #tpu.memory_space<vmem>>, %arg4: memref<4x2x128xf32, #tpu.memory_space<vmem>>) attributes {dimension_semantics = [#tpu.dimension_semantics<parallel>], iteration_bounds = array<i64: 1>, scalar_prefetch = 0 : i64, scratch_operands = 0 : i64, tpu.core_type = #tpu.core_type<tc>, window_params = [{transform_indices = @transform_0, window_bounds = array<i64: 4, 6, 128>}, {transform_indices = @transform_1, window_bounds = array<i64: 4>}, {transform_indices = @transform_2, window_bounds = array<i64: 4, 6, 128>}, {transform_indices = @transform_3, window_bounds = array<i64: 4, 2, 128>}]} {
    %c4_i32 = arith.constant 4 : i32
    %0 = arith.muli %arg0, %c4_i32 : i32
    %c0_i32 = arith.constant 0 : i32
    %1 = arith.addi %0, %c0_i32 : i32
    %2 = arith.index_cast %1 : i32 to index
    %3 = memref.load %arg2[%2] : memref<4xf32, #tpu.memory_space<smem>>
    %c0 = arith.constant 0 : index
    %c0_0 = arith.constant 0 : index
    %c0_1 = arith.constant 0 : index
    %4 = vector.load %arg1[%c0, %c0_0, %c0_1] : memref<4x6x128xf32, #tpu.memory_space<vmem>>, vector<1x6x128xf32>
    %5 = vector.shape_cast %4 : vector<1x6x128xf32> to vector<6x128xf32>
    %6 = vector.broadcast %3 : f32 to vector<6x128xf32>
    %7 = arith.mulf %5, %6 : vector<6x128xf32>
    %cst = arith.constant 0.000000e+00 : f32
    %cst_2 = arith.constant 1.000000e+00 : f32
    %8 = vector.broadcast %cst : f32 to vector<6x128xf32>
    %9 = arith.maximumf %8, %7 : vector<6x128xf32>
    %10 = vector.broadcast %cst_2 : f32 to vector<6x128xf32>
    %11 = arith.minimumf %10, %9 : vector<6x128xf32>
    %cst_3 = arith.constant 2.550000e+02 : f32
    %12 = vector.broadcast %cst_3 : f32 to vector<6x128xf32>
    %13 = arith.mulf %11, %12 : vector<6x128xf32>
    %14 = math.roundeven %13 : vector<6x128xf32>
    %cst_4 = arith.constant 0.00392156886 : f32
    %15 = vector.broadcast %cst_4 : f32 to vector<6x128xf32>
    %16 = arith.mulf %14, %15 : vector<6x128xf32>
    %c0_5 = arith.constant 0 : index
    %c0_6 = arith.constant 0 : index
    %c0_7 = arith.constant 0 : index
    %17 = vector.load %arg3[%c0_5, %c0_6, %c0_7] : memref<4x6x128xf32, #tpu.memory_space<vmem>>, vector<1x6x128xf32>
    %18 = vector.shape_cast %17 : vector<1x6x128xf32> to vector<6x128xf32>
    %19 = vector.shape_cast %16 : vector<6x128xf32> to vector<1x6x128xf32>
    tpu.vector_store %arg3[%c0_5, %c0_6, %c0_7], %19 {strides = array<i32>} : memref<4x6x128xf32, #tpu.memory_space<vmem>>, vector<1x6x128xf32>,
    %cst_8 = arith.constant 0.000000e+00 : f32
    %20 = vector.broadcast %cst_8 : f32 to vector<6x128xf32>
    %21 = arith.cmpf oeq, %14, %20 : vector<6x128xf32>
    %22 = arith.extui %21 : vector<6x128xi1> to vector<6x128xi32>
    %23 = arith.sitofp %22 : vector<6x128xi32> to vector<6x128xf32>
    %cst_9 = arith.constant dense<0.000000e+00> : vector<128xf32>
    %24 = vector.multi_reduction <add>, %23, %cst_9 [0] : vector<6x128xf32> to vector<128xf32>
    %25 = vector.shape_cast %24 : vector<128xf32> to vector<1x128xf32>
    %cst_10 = arith.constant 2.550000e+02 : f32
    %26 = vector.broadcast %cst_10 : f32 to vector<6x128xf32>
    %27 = arith.cmpf oeq, %14, %26 : vector<6x128xf32>
    %28 = arith.extui %27 : vector<6x128xi1> to vector<6x128xi32>
    %29 = arith.sitofp %28 : vector<6x128xi32> to vector<6x128xf32>
    %cst_11 = arith.constant dense<0.000000e+00> : vector<128xf32>
    %30 = vector.multi_reduction <add>, %29, %cst_11 [0] : vector<6x128xf32> to vector<128xf32>
    %31 = vector.shape_cast %30 : vector<128xf32> to vector<1x128xf32>
    %32 = tpu.concatenate %25, %31 in 0 : vector<1x128xf32>, vector<1x128xf32> -> vector<2x128xf32>
    %c0_12 = arith.constant 0 : index
    %c0_13 = arith.constant 0 : index
    %c0_14 = arith.constant 0 : index
    %33 = vector.load %arg4[%c0_12, %c0_13, %c0_14] : memref<4x2x128xf32, #tpu.memory_space<vmem>>, vector<1x2x128xf32>
    %34 = vector.shape_cast %33 : vector<1x2x128xf32> to vector<2x128xf32>
    %35 = vector.shape_cast %32 : vector<2x128xf32> to vector<1x2x128xf32>
    tpu.vector_store %arg4[%c0_12, %c0_13, %c0_14], %35 {strides = array<i32>} : memref<4x2x128xf32, #tpu.memory_space<vmem>>, vector<1x2x128xf32>,
    %c1_i32 = arith.constant 1 : i32
    %36 = arith.addi %0, %c1_i32 : i32
    %37 = arith.index_cast %36 : i32 to index
    %38 = memref.load %arg2[%37] : memref<4xf32, #tpu.memory_space<smem>>
    %c1 = arith.constant 1 : index
    %c0_15 = arith.constant 0 : index
    %c0_16 = arith.constant 0 : index
    %39 = vector.load %arg1[%c1, %c0_15, %c0_16] : memref<4x6x128xf32, #tpu.memory_space<vmem>>, vector<1x6x128xf32>
    %40 = vector.shape_cast %39 : vector<1x6x128xf32> to vector<6x128xf32>
    %41 = vector.broadcast %38 : f32 to vector<6x128xf32>
    %42 = arith.mulf %40, %41 : vector<6x128xf32>
    %cst_17 = arith.constant 0.000000e+00 : f32
    %cst_18 = arith.constant 1.000000e+00 : f32
    %43 = vector.broadcast %cst_17 : f32 to vector<6x128xf32>
    %44 = arith.maximumf %43, %42 : vector<6x128xf32>
    %45 = vector.broadcast %cst_18 : f32 to vector<6x128xf32>
    %46 = arith.minimumf %45, %44 : vector<6x128xf32>
    %cst_19 = arith.constant 2.550000e+02 : f32
    %47 = vector.broadcast %cst_19 : f32 to vector<6x128xf32>
    %48 = arith.mulf %46, %47 : vector<6x128xf32>
    %49 = math.roundeven %48 : vector<6x128xf32>
    %cst_20 = arith.constant 0.00392156886 : f32
    %50 = vector.broadcast %cst_20 : f32 to vector<6x128xf32>
    %51 = arith.mulf %49, %50 : vector<6x128xf32>
    %c1_21 = arith.constant 1 : index
    %c0_22 = arith.constant 0 : index
    %c0_23 = arith.constant 0 : index
    %52 = vector.load %arg3[%c1_21, %c0_22, %c0_23] : memref<4x6x128xf32, #tpu.memory_space<vmem>>, vector<1x6x128xf32>
    %53 = vector.shape_cast %52 : vector<1x6x128xf32> to vector<6x128xf32>
    %54 = vector.shape_cast %51 : vector<6x128xf32> to vector<1x6x128xf32>
    tpu.vector_store %arg3[%c1_21, %c0_22, %c0_23], %54 {strides = array<i32>} : memref<4x6x128xf32, #tpu.memory_space<vmem>>, vector<1x6x128xf32>,
    %cst_24 = arith.constant 0.000000e+00 : f32
    %55 = vector.broadcast %cst_24 : f32 to vector<6x128xf32>
    %56 = arith.cmpf oeq, %49, %55 : vector<6x128xf32>
    %57 = arith.extui %56 : vector<6x128xi1> to vector<6x128xi32>
    %58 = arith.sitofp %57 : vector<6x128xi32> to vector<6x128xf32>
    %cst_25 = arith.constant dense<0.000000e+00> : vector<128xf32>
    %59 = vector.multi_reduction <add>, %58, %cst_25 [0] : vector<6x128xf32> to vector<128xf32>
    %60 = vector.shape_cast %59 : vector<128xf32> to vector<1x128xf32>
    %cst_26 = arith.constant 2.550000e+02 : f32
    %61 = vector.broadcast %cst_26 : f32 to vector<6x128xf32>
    %62 = arith.cmpf oeq, %49, %61 : vector<6x128xf32>
    %63 = arith.extui %62 : vector<6x128xi1> to vector<6x128xi32>
    %64 = arith.sitofp %63 : vector<6x128xi32> to vector<6x128xf32>
    %cst_27 = arith.constant dense<0.000000e+00> : vector<128xf32>
    %65 = vector.multi_reduction <add>, %64, %cst_27 [0] : vector<6x128xf32> to vector<128xf32>
    %66 = vector.shape_cast %65 : vector<128xf32> to vector<1x128xf32>
    %67 = tpu.concatenate %60, %66 in 0 : vector<1x128xf32>, vector<1x128xf32> -> vector<2x128xf32>
    %c1_28 = arith.constant 1 : index
    %c0_29 = arith.constant 0 : index
    %c0_30 = arith.constant 0 : index
    %68 = vector.load %arg4[%c1_28, %c0_29, %c0_30] : memref<4x2x128xf32, #tpu.memory_space<vmem>>, vector<1x2x128xf32>
    %69 = vector.shape_cast %68 : vector<1x2x128xf32> to vector<2x128xf32>
    %70 = vector.shape_cast %67 : vector<2x128xf32> to vector<1x2x128xf32>
    tpu.vector_store %arg4[%c1_28, %c0_29, %c0_30], %70 {strides = array<i32>} : memref<4x2x128xf32, #tpu.memory_space<vmem>>, vector<1x2x128xf32>,
    %c2_i32 = arith.constant 2 : i32
    %71 = arith.addi %0, %c2_i32 : i32
    %72 = arith.index_cast %71 : i32 to index
    %73 = memref.load %arg2[%72] : memref<4xf32, #tpu.memory_space<smem>>
    %c2 = arith.constant 2 : index
    %c0_31 = arith.constant 0 : index
    %c0_32 = arith.constant 0 : index
    %74 = vector.load %arg1[%c2, %c0_31, %c0_32] : memref<4x6x128xf32, #tpu.memory_space<vmem>>, vector<1x6x128xf32>
    %75 = vector.shape_cast %74 : vector<1x6x128xf32> to vector<6x128xf32>
    %76 = vector.broadcast %73 : f32 to vector<6x128xf32>
    %77 = arith.mulf %75, %76 : vector<6x128xf32>
    %cst_33 = arith.constant 0.000000e+00 : f32
    %cst_34 = arith.constant 1.000000e+00 : f32
    %78 = vector.broadcast %cst_33 : f32 to vector<6x128xf32>
    %79 = arith.maximumf %78, %77 : vector<6x128xf32>
    %80 = vector.broadcast %cst_34 : f32 to vector<6x128xf32>
    %81 = arith.minimumf %80, %79 : vector<6x128xf32>
    %cst_35 = arith.constant 2.550000e+02 : f32
    %82 = vector.broadcast %cst_35 : f32 to vector<6x128xf32>
    %83 = arith.mulf %81, %82 : vector<6x128xf32>
    %84 = math.roundeven %83 : vector<6x128xf32>
    %cst_36 = arith.constant 0.00392156886 : f32
    %85 = vector.broadcast %cst_36 : f32 to vector<6x128xf32>
    %86 = arith.mulf %84, %85 : vector<6x128xf32>
    %c2_37 = arith.constant 2 : index
    %c0_38 = arith.constant 0 : index
    %c0_39 = arith.constant 0 : index
    %87 = vector.load %arg3[%c2_37, %c0_38, %c0_39] : memref<4x6x128xf32, #tpu.memory_space<vmem>>, vector<1x6x128xf32>
    %88 = vector.shape_cast %87 : vector<1x6x128xf32> to vector<6x128xf32>
    %89 = vector.shape_cast %86 : vector<6x128xf32> to vector<1x6x128xf32>
    tpu.vector_store %arg3[%c2_37, %c0_38, %c0_39], %89 {strides = array<i32>} : memref<4x6x128xf32, #tpu.memory_space<vmem>>, vector<1x6x128xf32>,
    %cst_40 = arith.constant 0.000000e+00 : f32
    %90 = vector.broadcast %cst_40 : f32 to vector<6x128xf32>
    %91 = arith.cmpf oeq, %84, %90 : vector<6x128xf32>
    %92 = arith.extui %91 : vector<6x128xi1> to vector<6x128xi32>
    %93 = arith.sitofp %92 : vector<6x128xi32> to vector<6x128xf32>
    %cst_41 = arith.constant dense<0.000000e+00> : vector<128xf32>
    %94 = vector.multi_reduction <add>, %93, %cst_41 [0] : vector<6x128xf32> to vector<128xf32>
    %95 = vector.shape_cast %94 : vector<128xf32> to vector<1x128xf32>
    %cst_42 = arith.constant 2.550000e+02 : f32
    %96 = vector.broadcast %cst_42 : f32 to vector<6x128xf32>
    %97 = arith.cmpf oeq, %84, %96 : vector<6x128xf32>
    %98 = arith.extui %97 : vector<6x128xi1> to vector<6x128xi32>
    %99 = arith.sitofp %98 : vector<6x128xi32> to vector<6x128xf32>
    %cst_43 = arith.constant dense<0.000000e+00> : vector<128xf32>
    %100 = vector.multi_reduction <add>, %99, %cst_43 [0] : vector<6x128xf32> to vector<128xf32>
    %101 = vector.shape_cast %100 : vector<128xf32> to vector<1x128xf32>
    %102 = tpu.concatenate %95, %101 in 0 : vector<1x128xf32>, vector<1x128xf32> -> vector<2x128xf32>
    %c2_44 = arith.constant 2 : index
    %c0_45 = arith.constant 0 : index
    %c0_46 = arith.constant 0 : index
    %103 = vector.load %arg4[%c2_44, %c0_45, %c0_46] : memref<4x2x128xf32, #tpu.memory_space<vmem>>, vector<1x2x128xf32>
    %104 = vector.shape_cast %103 : vector<1x2x128xf32> to vector<2x128xf32>
    %105 = vector.shape_cast %102 : vector<2x128xf32> to vector<1x2x128xf32>
    tpu.vector_store %arg4[%c2_44, %c0_45, %c0_46], %105 {strides = array<i32>} : memref<4x2x128xf32, #tpu.memory_space<vmem>>, vector<1x2x128xf32>,
    %c3_i32 = arith.constant 3 : i32
    %106 = arith.addi %0, %c3_i32 : i32
    %107 = arith.index_cast %106 : i32 to index
    %108 = memref.load %arg2[%107] : memref<4xf32, #tpu.memory_space<smem>>
    %c3 = arith.constant 3 : index
    %c0_47 = arith.constant 0 : index
    %c0_48 = arith.constant 0 : index
    %109 = vector.load %arg1[%c3, %c0_47, %c0_48] : memref<4x6x128xf32, #tpu.memory_space<vmem>>, vector<1x6x128xf32>
    %110 = vector.shape_cast %109 : vector<1x6x128xf32> to vector<6x128xf32>
    %111 = vector.broadcast %108 : f32 to vector<6x128xf32>
    %112 = arith.mulf %110, %111 : vector<6x128xf32>
    %cst_49 = arith.constant 0.000000e+00 : f32
    %cst_50 = arith.constant 1.000000e+00 : f32
    %113 = vector.broadcast %cst_49 : f32 to vector<6x128xf32>
    %114 = arith.maximumf %113, %112 : vector<6x128xf32>
    %115 = vector.broadcast %cst_50 : f32 to vector<6x128xf32>
    %116 = arith.minimumf %115, %114 : vector<6x128xf32>
    %cst_51 = arith.constant 2.550000e+02 : f32
    %117 = vector.broadcast %cst_51 : f32 to vector<6x128xf32>
    %118 = arith.mulf %116, %117 : vector<6x128xf32>
    %119 = math.roundeven %118 : vector<6x128xf32>
    %cst_52 = arith.constant 0.00392156886 : f32
    %120 = vector.broadcast %cst_52 : f32 to vector<6x128xf32>
    %121 = arith.mulf %119, %120 : vector<6x128xf32>
    %c3_53 = arith.constant 3 : index
    %c0_54 = arith.constant 0 : index
    %c0_55 = arith.constant 0 : index
    %122 = vector.load %arg3[%c3_53, %c0_54, %c0_55] : memref<4x6x128xf32, #tpu.memory_space<vmem>>, vector<1x6x128xf32>
    %123 = vector.shape_cast %122 : vector<1x6x128xf32> to vector<6x128xf32>
    %124 = vector.shape_cast %121 : vector<6x128xf32> to vector<1x6x128xf32>
    tpu.vector_store %arg3[%c3_53, %c0_54, %c0_55], %124 {strides = array<i32>} : memref<4x6x128xf32, #tpu.memory_space<vmem>>, vector<1x6x128xf32>,
    %cst_56 = arith.constant 0.000000e+00 : f32
    %125 = vector.broadcast %cst_56 : f32 to vector<6x128xf32>
    %126 = arith.cmpf oeq, %119, %125 : vector<6x128xf32>
    %127 = arith.extui %126 : vector<6x128xi1> to vector<6x128xi32>
    %128 = arith.sitofp %127 : vector<6x128xi32> to vector<6x128xf32>
    %cst_57 = arith.constant dense<0.000000e+00> : vector<128xf32>
    %129 = vector.multi_reduction <add>, %128, %cst_57 [0] : vector<6x128xf32> to vector<128xf32>
    %130 = vector.shape_cast %129 : vector<128xf32> to vector<1x128xf32>
    %cst_58 = arith.constant 2.550000e+02 : f32
    %131 = vector.broadcast %cst_58 : f32 to vector<6x128xf32>
    %132 = arith.cmpf oeq, %119, %131 : vector<6x128xf32>
    %133 = arith.extui %132 : vector<6x128xi1> to vector<6x128xi32>
    %134 = arith.sitofp %133 : vector<6x128xi32> to vector<6x128xf32>
    %cst_59 = arith.constant dense<0.000000e+00> : vector<128xf32>
    %135 = vector.multi_reduction <add>, %134, %cst_59 [0] : vector<6x128xf32> to vector<128xf32>
    %136 = vector.shape_cast %135 : vector<128xf32> to vector<1x128xf32>
    %137 = tpu.concatenate %130, %136 in 0 : vector<1x128xf32>, vector<1x128xf32> -> vector<2x128xf32>
    %c3_60 = arith.constant 3 : index
    %c0_61 = arith.constant 0 : index
    %c0_62 = arith.constant 0 : index
    %138 = vector.load %arg4[%c3_60, %c0_61, %c0_62] : memref<4x2x128xf32, #tpu.memory_space<vmem>>, vector<1x2x128xf32>
    %139 = vector.shape_cast %138 : vector<1x2x128xf32> to vector<2x128xf32>
    %140 = vector.shape_cast %137 : vector<2x128xf32> to vector<1x2x128xf32>
    tpu.vector_store %arg4[%c3_60, %c0_61, %c0_62], %140 {strides = array<i32>} : memref<4x2x128xf32, #tpu.memory_space<vmem>>, vector<1x2x128xf32>,
    return
  }
  func.func @transform_0(%arg0: i32) -> (i32, i32, i32) {
    %c0_i32 = arith.constant 0 : i32
    %0 = arith.addi %arg0, %c0_i32 : i32
    %c0_i32_0 = arith.constant 0 : i32
    %c0_i32_1 = arith.constant 0 : i32
    %c0_i32_2 = arith.constant 0 : i32
    return %0, %c0_i32_0, %c0_i32_1 : i32, i32, i32
  }
  func.func @transform_1(%arg0: i32) -> i32 {
    %c0_i32 = arith.constant 0 : i32
    %c0_i32_0 = arith.constant 0 : i32
    return %c0_i32 : i32
  }
  func.func @transform_2(%arg0: i32) -> (i32, i32, i32) {
    %c0_i32 = arith.constant 0 : i32
    %c0_i32_0 = arith.constant 0 : i32
    %c0_i32_1 = arith.constant 0 : i32
    return %arg0, %c0_i32, %c0_i32_0 : i32, i32, i32
  }
  func.func @transform_3(%arg0: i32) -> (i32, i32, i32) {
    %c0_i32 = arith.constant 0 : i32
    %c0_i32_0 = arith.constant 0 : i32
    %c0_i32_1 = arith.constant 0 : i32
    return %arg0, %c0_i32, %c0_i32_0 : i32, i32, i32
  }
}

module attributes {stable_mosaic.version = 11 : i64} {
  func.func @kernel(%arg0: i32, %arg1: memref<4x6x128xf32, #tpu.memory_space<vmem>>, %arg2: memref<4xf32, #tpu.memory_space<smem>>, %arg3: memref<4x6x128xf32, #tpu.memory_space<vmem>>) attributes {dimension_semantics = [#tpu.dimension_semantics<parallel>], iteration_bounds = array<i64: 1>, scalar_prefetch = 0 : i64, scratch_operands = 0 : i64, tpu.core_type = #tpu.core_type<tc>, window_params = [{transform_indices = @transform_0, window_bounds = array<i64: 4, 6, 128>}, {transform_indices = @transform_1, window_bounds = array<i64: 4>}, {transform_indices = @transform_2, window_bounds = array<i64: 4, 6, 128>}]} {
    %c4_i32 = arith.constant 4 : i32
    %0 = arith.muli %arg0, %c4_i32 : i32
    %c0_i32 = arith.constant 0 : i32
    %1 = arith.addi %0, %c0_i32 : i32
    %2 = arith.index_cast %1 : i32 to index
    %3 = memref.load %arg2[%2] : memref<4xf32, #tpu.memory_space<smem>>
    %c0 = arith.constant 0 : index
    %c0_0 = arith.constant 0 : index
    %c0_1 = arith.constant 0 : index
    %4 = vector.load %arg1[%c0, %c0_0, %c0_1] : memref<4x6x128xf32, #tpu.memory_space<vmem>>, vector<1x6x128xf32>
    %5 = vector.shape_cast %4 : vector<1x6x128xf32> to vector<6x128xf32>
    %6 = vector.broadcast %3 : f32 to vector<6x128xf32>
    %7 = arith.mulf %5, %6 : vector<6x128xf32>
    %cst = arith.constant 0.000000e+00 : f32
    %cst_2 = arith.constant 1.000000e+00 : f32
    %8 = vector.broadcast %cst : f32 to vector<6x128xf32>
    %9 = arith.maximumf %8, %7 : vector<6x128xf32>
    %10 = vector.broadcast %cst_2 : f32 to vector<6x128xf32>
    %11 = arith.minimumf %10, %9 : vector<6x128xf32>
    %cst_3 = arith.constant 2.550000e+02 : f32
    %12 = vector.broadcast %cst_3 : f32 to vector<6x128xf32>
    %13 = arith.mulf %11, %12 : vector<6x128xf32>
    %14 = math.roundeven %13 : vector<6x128xf32>
    %cst_4 = arith.constant 0.00392156886 : f32
    %15 = vector.broadcast %cst_4 : f32 to vector<6x128xf32>
    %16 = arith.mulf %14, %15 : vector<6x128xf32>
    %c0_5 = arith.constant 0 : index
    %c0_6 = arith.constant 0 : index
    %c0_7 = arith.constant 0 : index
    %17 = vector.load %arg3[%c0_5, %c0_6, %c0_7] : memref<4x6x128xf32, #tpu.memory_space<vmem>>, vector<1x6x128xf32>
    %18 = vector.shape_cast %17 : vector<1x6x128xf32> to vector<6x128xf32>
    %19 = vector.shape_cast %16 : vector<6x128xf32> to vector<1x6x128xf32>
    tpu.vector_store %arg3[%c0_5, %c0_6, %c0_7], %19 {strides = array<i32>} : memref<4x6x128xf32, #tpu.memory_space<vmem>>, vector<1x6x128xf32>,
    %c1_i32 = arith.constant 1 : i32
    %20 = arith.addi %0, %c1_i32 : i32
    %21 = arith.index_cast %20 : i32 to index
    %22 = memref.load %arg2[%21] : memref<4xf32, #tpu.memory_space<smem>>
    %c1 = arith.constant 1 : index
    %c0_8 = arith.constant 0 : index
    %c0_9 = arith.constant 0 : index
    %23 = vector.load %arg1[%c1, %c0_8, %c0_9] : memref<4x6x128xf32, #tpu.memory_space<vmem>>, vector<1x6x128xf32>
    %24 = vector.shape_cast %23 : vector<1x6x128xf32> to vector<6x128xf32>
    %25 = vector.broadcast %22 : f32 to vector<6x128xf32>
    %26 = arith.mulf %24, %25 : vector<6x128xf32>
    %cst_10 = arith.constant 0.000000e+00 : f32
    %cst_11 = arith.constant 1.000000e+00 : f32
    %27 = vector.broadcast %cst_10 : f32 to vector<6x128xf32>
    %28 = arith.maximumf %27, %26 : vector<6x128xf32>
    %29 = vector.broadcast %cst_11 : f32 to vector<6x128xf32>
    %30 = arith.minimumf %29, %28 : vector<6x128xf32>
    %cst_12 = arith.constant 2.550000e+02 : f32
    %31 = vector.broadcast %cst_12 : f32 to vector<6x128xf32>
    %32 = arith.mulf %30, %31 : vector<6x128xf32>
    %33 = math.roundeven %32 : vector<6x128xf32>
    %cst_13 = arith.constant 0.00392156886 : f32
    %34 = vector.broadcast %cst_13 : f32 to vector<6x128xf32>
    %35 = arith.mulf %33, %34 : vector<6x128xf32>
    %c1_14 = arith.constant 1 : index
    %c0_15 = arith.constant 0 : index
    %c0_16 = arith.constant 0 : index
    %36 = vector.load %arg3[%c1_14, %c0_15, %c0_16] : memref<4x6x128xf32, #tpu.memory_space<vmem>>, vector<1x6x128xf32>
    %37 = vector.shape_cast %36 : vector<1x6x128xf32> to vector<6x128xf32>
    %38 = vector.shape_cast %35 : vector<6x128xf32> to vector<1x6x128xf32>
    tpu.vector_store %arg3[%c1_14, %c0_15, %c0_16], %38 {strides = array<i32>} : memref<4x6x128xf32, #tpu.memory_space<vmem>>, vector<1x6x128xf32>,
    %c2_i32 = arith.constant 2 : i32
    %39 = arith.addi %0, %c2_i32 : i32
    %40 = arith.index_cast %39 : i32 to index
    %41 = memref.load %arg2[%40] : memref<4xf32, #tpu.memory_space<smem>>
    %c2 = arith.constant 2 : index
    %c0_17 = arith.constant 0 : index
    %c0_18 = arith.constant 0 : index
    %42 = vector.load %arg1[%c2, %c0_17, %c0_18] : memref<4x6x128xf32, #tpu.memory_space<vmem>>, vector<1x6x128xf32>
    %43 = vector.shape_cast %42 : vector<1x6x128xf32> to vector<6x128xf32>
    %44 = vector.broadcast %41 : f32 to vector<6x128xf32>
    %45 = arith.mulf %43, %44 : vector<6x128xf32>
    %cst_19 = arith.constant 0.000000e+00 : f32
    %cst_20 = arith.constant 1.000000e+00 : f32
    %46 = vector.broadcast %cst_19 : f32 to vector<6x128xf32>
    %47 = arith.maximumf %46, %45 : vector<6x128xf32>
    %48 = vector.broadcast %cst_20 : f32 to vector<6x128xf32>
    %49 = arith.minimumf %48, %47 : vector<6x128xf32>
    %cst_21 = arith.constant 2.550000e+02 : f32
    %50 = vector.broadcast %cst_21 : f32 to vector<6x128xf32>
    %51 = arith.mulf %49, %50 : vector<6x128xf32>
    %52 = math.roundeven %51 : vector<6x128xf32>
    %cst_22 = arith.constant 0.00392156886 : f32
    %53 = vector.broadcast %cst_22 : f32 to vector<6x128xf32>
    %54 = arith.mulf %52, %53 : vector<6x128xf32>
    %c2_23 = arith.constant 2 : index
    %c0_24 = arith.constant 0 : index
    %c0_25 = arith.constant 0 : index
    %55 = vector.load %arg3[%c2_23, %c0_24, %c0_25] : memref<4x6x128xf32, #tpu.memory_space<vmem>>, vector<1x6x128xf32>
    %56 = vector.shape_cast %55 : vector<1x6x128xf32> to vector<6x128xf32>
    %57 = vector.shape_cast %54 : vector<6x128xf32> to vector<1x6x128xf32>
    tpu.vector_store %arg3[%c2_23, %c0_24, %c0_25], %57 {strides = array<i32>} : memref<4x6x128xf32, #tpu.memory_space<vmem>>, vector<1x6x128xf32>,
    %c3_i32 = arith.constant 3 : i32
    %58 = arith.addi %0, %c3_i32 : i32
    %59 = arith.index_cast %58 : i32 to index
    %60 = memref.load %arg2[%59] : memref<4xf32, #tpu.memory_space<smem>>
    %c3 = arith.constant 3 : index
    %c0_26 = arith.constant 0 : index
    %c0_27 = arith.constant 0 : index
    %61 = vector.load %arg1[%c3, %c0_26, %c0_27] : memref<4x6x128xf32, #tpu.memory_space<vmem>>, vector<1x6x128xf32>
    %62 = vector.shape_cast %61 : vector<1x6x128xf32> to vector<6x128xf32>
    %63 = vector.broadcast %60 : f32 to vector<6x128xf32>
    %64 = arith.mulf %62, %63 : vector<6x128xf32>
    %cst_28 = arith.constant 0.000000e+00 : f32
    %cst_29 = arith.constant 1.000000e+00 : f32
    %65 = vector.broadcast %cst_28 : f32 to vector<6x128xf32>
    %66 = arith.maximumf %65, %64 : vector<6x128xf32>
    %67 = vector.broadcast %cst_29 : f32 to vector<6x128xf32>
    %68 = arith.minimumf %67, %66 : vector<6x128xf32>
    %cst_30 = arith.constant 2.550000e+02 : f32
    %69 = vector.broadcast %cst_30 : f32 to vector<6x128xf32>
    %70 = arith.mulf %68, %69 : vector<6x128xf32>
    %71 = math.roundeven %70 : vector<6x128xf32>
    %cst_31 = arith.constant 0.00392156886 : f32
    %72 = vector.broadcast %cst_31 : f32 to vector<6x128xf32>
    %73 = arith.mulf %71, %72 : vector<6x128xf32>
    %c3_32 = arith.constant 3 : index
    %c0_33 = arith.constant 0 : index
    %c0_34 = arith.constant 0 : index
    %74 = vector.load %arg3[%c3_32, %c0_33, %c0_34] : memref<4x6x128xf32, #tpu.memory_space<vmem>>, vector<1x6x128xf32>
    %75 = vector.shape_cast %74 : vector<1x6x128xf32> to vector<6x128xf32>
    %76 = vector.shape_cast %73 : vector<6x128xf32> to vector<1x6x128xf32>
    tpu.vector_store %arg3[%c3_32, %c0_33, %c0_34], %76 {strides = array<i32>} : memref<4x6x128xf32, #tpu.memory_space<vmem>>, vector<1x6x128xf32>,
    return
  }
  func.func @transform_0(%arg0: i32) -> (i32, i32, i32) {
    %c1_i32 = arith.constant 1 : i32
    %0 = arith.addi %arg0, %c1_i32 : i32
    %c0_i32 = arith.constant 0 : i32
    %c0_i32_0 = arith.constant 0 : i32
    %c0_i32_1 = arith.constant 0 : i32
    return %0, %c0_i32, %c0_i32_0 : i32, i32, i32
  }
  func.func @transform_1(%arg0: i32) -> i32 {
    %c0_i32 = arith.constant 0 : i32
    %c0_i32_0 = arith.constant 0 : i32
    return %c0_i32 : i32
  }
  func.func @transform_2(%arg0: i32) -> (i32, i32, i32) {
    %c0_i32 = arith.constant 0 : i32
    %c0_i32_0 = arith.constant 0 : i32
    %c0_i32_1 = arith.constant 0 : i32
    return %arg0, %c0_i32, %c0_i32_0 : i32, i32, i32
  }
}

</mosaic_0001>

<llo_original>
// kernel: combine_model_forward.4
$region0: #{combine_model_forward.4}
  #allocation0 [shape = 'u32[]', space=smem, size = 0x4, offset = 0x4, fixed_abs, tag = 'smem constant byte address 0x4 - core index']
  #allocation1 [shape = 'u32[144,128]{1,0:T(1,128)}', space=vmem, size = 0x12000, scoped, tag = 'internal scratch']
  %s0 = inlined_call_operand.vmem [shape: f32[8,6,128], index: 0, kind: input, shape index: {}]
  %s1 = inlined_call_operand.vmem [shape: f32[4], index: 1, kind: input, shape index: {}]
  %s2 = inlined_call_operand.vmem [shape: f32[4,6,128], index: 2, kind: output, shape index: {0}]
  %s3 = inlined_call_operand.vmem [shape: f32[4,6,128], index: 3, kind: output, shape index: {1}]
  %4 = xla_tuple %s2, %s3
  %s5 = sld [smem:[#allocation0]]
  $region30: #{combine_model_forward.4} parent=0
    _
  %s7 = ssub.s32 1, %s5
  %s8 = scalar_select 0, %s7, %s5
  $region1: #{combine_model_forward.4} parent=0
    #allocation2 [shape = 'u8[512]{0}', space=smem, size = 0x200, scoped, tag = 'input window, operand 1, single buffered']
    #allocation3 [shape = 's32[1]{0}', space=sflag, size = 0x4, scoped, tag = 'scoped memory for combine_model_forward.4']
    %9 = vsyncpa [#allocation3], 0
    // Predicated region
    $region2: #{combine_model_forward.4} parent=1 // pred_check
      _
    $region3: #{combine_model_forward.4} parent=1 // pred_check_branch
      %11 = sbr.rel (0) target = $region5
    $region4: #{combine_model_forward.4} parent=1 // pred_region
      _
    $region5: #{combine_model_forward.4} parent=1 // pred_fallthru
      _
    // Predicated region
    $region6: #{combine_model_forward.4} parent=1 // pred_check
      _
    $region7: #{combine_model_forward.4} parent=1 // pred_check_branch
      %13 = sbr.rel (0) target = $region9
    $region8: #{combine_model_forward.4} parent=1 // pred_region
      %s15 = ssub.s32 16, 16
      %16 = vsyncadd [#allocation3], %s15
      %s18 = sshll.u32 %s1, 4
      %s19 = int_to_ptr.vmem [resolvable:$true] %s18
      %21 = dma.vmem_to_smem %s19, 16, [#allocation2], [#allocation3]
    $region9: #{combine_model_forward.4} parent=1 // pred_fallthru
      _
    // Predicated region
    $region10: #{combine_model_forward.4} parent=1 // pred_check
      _
    $region11: #{combine_model_forward.4} parent=1 // pred_check_branch
      %23 = sbr.rel (0) target = $region13
    $region12: #{combine_model_forward.4} parent=1 // pred_region
      %24 = dma.done [#allocation3], 16
    $region13: #{combine_model_forward.4} parent=1 // pred_fallthru
      _
    %25 = sfence
    %s26 = smul.u32 0, 4
    %s27 = sld [smem:[#allocation2 + %s26]]
    %v28 = vld [vmem:[%s0] sm:$0x3f]
    %v29 = vstv %s27
    %v30 = vmul.f32 %v28, %v29
    %v31 = vmax.f32 %v30, 0.0
    %v32 = vmin.f32 %v31, 1.0
    %v33 = vmul.f32 %v32, 255.0
    %v34 = vround.ne.pseudo %v33
    %v35 = vmul.f32 %v34, 0.003921569
    %36 = vst [vmem:[%s2] sm:$0x3f] %v35
    %37 = vst [vmem:[%s3] sm:$0x3f] %v32
    %s38 = sadd.s32 %s26, 1
    %s39 = sld [smem:[#allocation2 + %s38]]
    %s40 = scalar_lea.vmem %s0, 8
    %v41 = vld [vmem:[%s40] sm:$0x3f]
    %v42 = vstv %s39
    %v43 = vmul.f32 %v41, %v42
    %v44 = vmax.f32 %v43, 0.0
    %v45 = vmin.f32 %v44, 1.0
    %v46 = vmul.f32 %v45, 255.0
    %v47 = vround.ne.pseudo %v46
    %v48 = vmul.f32 %v47, 0.003921569
    %s49 = scalar_lea.vmem %s2, 8
    %50 = vst [vmem:[%s49] sm:$0x3f] %v48
    %s51 = scalar_lea.vmem %s3, 8
    %52 = vst [vmem:[%s51] sm:$0x3f] %v45
    %s53 = sadd.s32 %s26, 2
    %s54 = sld [smem:[#allocation2 + %s53]]
    %s55 = scalar_lea.vmem %s0, 16
    %v56 = vld [vmem:[%s55] sm:$0x3f]
    %v57 = vstv %s54
    %v58 = vmul.f32 %v56, %v57
    %v59 = vmax.f32 %v58, 0.0
    %v60 = vmin.f32 %v59, 1.0
    %v61 = vmul.f32 %v60, 255.0
    %v62 = vround.ne.pseudo %v61
    %v63 = vmul.f32 %v62, 0.003921569
    %s64 = scalar_lea.vmem %s2, 16
    %65 = vst [vmem:[%s64] sm:$0x3f] %v63
    %s66 = scalar_lea.vmem %s3, 16
    %67 = vst [vmem:[%s66] sm:$0x3f] %v60
    %s68 = sadd.s32 %s26, 3
    %s69 = sld [smem:[#allocation2 + %s68]]
    %s70 = scalar_lea.vmem %s0, 24
    %v71 = vld [vmem:[%s70] sm:$0x3f]
    %v72 = vstv %s69
    %v73 = vmul.f32 %v71, %v72
    %v74 = vmax.f32 %v73, 0.0
    %v75 = vmin.f32 %v74, 1.0
    %v76 = vmul.f32 %v75, 255.0
    %v77 = vround.ne.pseudo %v76
    %v78 = vmul.f32 %v77, 0.003921569
    %s79 = scalar_lea.vmem %s2, 24
    %80 = vst [vmem:[%s79] sm:$0x3f] %v78
    %s81 = scalar_lea.vmem %s3, 24
    %82 = vst [vmem:[%s81] sm:$0x3f] %v75
    // Predicated region
    $region14: #{combine_model_forward.4} parent=1 // pred_check
      _
    $region15: #{combine_model_forward.4} parent=1 // pred_check_branch
      %84 = sbr.rel (0) target = $region17
    $region16: #{combine_model_forward.4} parent=1 // pred_region
      _
    $region17: #{combine_model_forward.4} parent=1 // pred_fallthru
      _
    // Predicated region
    $region18: #{combine_model_forward.4} parent=1 // pred_check
      _
    $region19: #{combine_model_forward.4} parent=1 // pred_check_branch
      %86 = sbr.rel (0) target = $region21
    $region20: #{combine_model_forward.4} parent=1 // pred_region
      _
    $region21: #{combine_model_forward.4} parent=1 // pred_fallthru
      _
    // Predicated region
    $region22: #{combine_model_forward.4} parent=1 // pred_check
      _
    $region23: #{combine_model_forward.4} parent=1 // pred_check_branch
      %88 = sbr.rel (0) target = $region25
    $region24: #{combine_model_forward.4} parent=1 // pred_region
      _
    $region25: #{combine_model_forward.4} parent=1 // pred_fallthru
      _
    // Predicated region
    $region26: #{combine_model_forward.4} parent=1 // pred_check
      _
    $region27: #{combine_model_forward.4} parent=1 // pred_check_branch
      %90 = sbr.rel (0) target = $region29
    $region28: #{combine_model_forward.4} parent=1 // pred_region
      _
    $region29: #{combine_model_forward.4} parent=1 // pred_fallthru
      _
    %91 = vsyncpa [#allocation3], 1

// kernel: combine_model_forward.5
$region0: #{combine_model_forward.5}
  #allocation0 [shape = 'u32[]', space=smem, size = 0x4, offset = 0x4, fixed_abs, tag = 'smem constant byte address 0x4 - core index']
  #allocation1 [shape = 'u32[144,128]{1,0:T(1,128)}', space=vmem, size = 0x12000, scoped, tag = 'internal scratch']
  %s0 = inlined_call_operand.vmem [shape: f32[8,6,128], index: 0, kind: input, shape index: {}]
  %s1 = inlined_call_operand.vmem [shape: f32[4], index: 1, kind: input, shape index: {}]
  %s2 = inlined_call_operand.vmem [shape: f32[4,6,128], index: 2, kind: output, shape index: {}]
  %s3 = sld [smem:[#allocation0]]
  $region22: #{combine_model_forward.5} parent=0
    _
  %s5 = ssub.s32 1, %s3
  %s6 = scalar_select 0, %s5, %s3
  $region1: #{combine_model_forward.5} parent=0
    #allocation2 [shape = 'u8[512]{0}', space=smem, size = 0x200, scoped, tag = 'input window, operand 1, single buffered']
    #allocation3 [shape = 's32[1]{0}', space=sflag, size = 0x4, scoped, tag = 'scoped memory for combine_model_forward.5']
    %7 = vsyncpa [#allocation3], 0
    // Predicated region
    $region2: #{combine_model_forward.5} parent=1 // pred_check
      _
    $region3: #{combine_model_forward.5} parent=1 // pred_check_branch
      %9 = sbr.rel (0) target = $region5
    $region4: #{combine_model_forward.5} parent=1 // pred_region
      %s10 = sadd.s32 0, 1
      %s11 = smul.u32 4, %s10
      %p12 = scmp.lt.s32.totalorder %s11, 7
      %s13 = scalar_select %p12, %s11, 7
      %s14 = smul.addr %s13, 8
      %s15 = scalar_lea.vmem %s0, %s14
      %s16 = sadd.s32 0, 1
      %s17 = smul.u32 4, %s16
    $region5: #{combine_model_forward.5} parent=1 // pred_fallthru
      _
    // Predicated region
    $region6: #{combine_model_forward.5} parent=1 // pred_check
      _
    $region7: #{combine_model_forward.5} parent=1 // pred_check_branch
      %19 = sbr.rel (0) target = $region9
    $region8: #{combine_model_forward.5} parent=1 // pred_region
      %s21 = ssub.s32 16, 16
      %22 = vsyncadd [#allocation3], %s21
      %s24 = sshll.u32 %s1, 4
      %s25 = int_to_ptr.vmem [resolvable:$true] %s24
      %27 = dma.vmem_to_smem %s25, 16, [#allocation2], [#allocation3]
    $region9: #{combine_model_forward.5} parent=1 // pred_fallthru
      _
    // Predicated region
    $region10: #{combine_model_forward.5} parent=1 // pred_check
      _
    $region11: #{combine_model_forward.5} parent=1 // pred_check_branch
      %29 = sbr.rel (0) target = $region13
    $region12: #{combine_model_forward.5} parent=1 // pred_region
      %30 = dma.done [#allocation3], 16
    $region13: #{combine_model_forward.5} parent=1 // pred_fallthru
      _
    %31 = sfence
    %s32 = sadd.s32 0, 1
    %s33 = smul.u32 4, %s32
    %p34 = scmp.lt.s32.totalorder %s33, 7
    %s35 = scalar_select %p34, %s33, 7
    %s36 = smul.addr %s35, 8
    %s37 = scalar_lea.vmem %s0, %s36
    %s38 = sadd.s32 0, 1
    %s39 = smul.u32 4, %s38
    %p40 = scmp.lt.s32.totalorder %s39, 7
    %s41 = scalar_select %p40, %s39, 7
    %s42 = smul.addr %s41, 8
    %s43 = scalar_lea.vmem %s0, %s42
    %s44 = sadd.s32 0, 1
    %s45 = smul.u32 4, %s44
    %s46 = smul.u32 0, 4
    %s47 = sld [smem:[#allocation2 + %s46]]
    %v48 = vld [vmem:[%s43] sm:$0x3f]
    %v49 = vstv %s47
    %v50 = vmul.f32 %v48, %v49
    %v51 = vmax.f32 %v50, 0.0
    %v52 = vmin.f32 %v51, 1.0
    %v53 = vmul.f32 %v52, 255.0
    %v54 = vround.ne.pseudo %v53
    %v55 = vmul.f32 %v54, 0.003921569
    %56 = vst [vmem:[%s2] sm:$0x3f] %v55
    %s57 = sadd.s32 %s46, 1
    %s58 = sld [smem:[#allocation2 + %s57]]
    %s59 = scalar_lea.vmem %s43, 8
    %v60 = vld [vmem:[%s59] sm:$0x3f]
    %v61 = vstv %s58
    %v62 = vmul.f32 %v60, %v61
    %v63 = vmax.f32 %v62, 0.0
    %v64 = vmin.f32 %v63, 1.0
    %v65 = vmul.f32 %v64, 255.0
    %v66 = vround.ne.pseudo %v65
    %v67 = vmul.f32 %v66, 0.003921569
    %s68 = scalar_lea.vmem %s2, 8
    %69 = vst [vmem:[%s68] sm:$0x3f] %v67
    %s70 = sadd.s32 %s46, 2
    %s71 = sld [smem:[#allocation2 + %s70]]
    %s72 = scalar_lea.vmem %s43, 16
    %v73 = vld [vmem:[%s72] sm:$0x3f]
    %v74 = vstv %s71
    %v75 = vmul.f32 %v73, %v74
    %v76 = vmax.f32 %v75, 0.0
    %v77 = vmin.f32 %v76, 1.0
    %v78 = vmul.f32 %v77, 255.0
    %v79 = vround.ne.pseudo %v78
    %v80 = vmul.f32 %v79, 0.003921569
    %s81 = scalar_lea.vmem %s2, 16
    %82 = vst [vmem:[%s81] sm:$0x3f] %v80
    %s83 = sadd.s32 %s46, 3
    %s84 = sld [smem:[#allocation2 + %s83]]
    %s85 = scalar_lea.vmem %s43, 24
    %v86 = vld [vmem:[%s85] sm:$0x3f]
    %v87 = vstv %s84
    %v88 = vmul.f32 %v86, %v87
    %v89 = vmax.f32 %v88, 0.0
    %v90 = vmin.f32 %v89, 1.0
    %v91 = vmul.f32 %v90, 255.0
    %v92 = vround.ne.pseudo %v91
    %v93 = vmul.f32 %v92, 0.003921569
    %s94 = scalar_lea.vmem %s2, 24
    %95 = vst [vmem:[%s94] sm:$0x3f] %v93
    // Predicated region
    $region14: #{combine_model_forward.5} parent=1 // pred_check
      _
    $region15: #{combine_model_forward.5} parent=1 // pred_check_branch
      %97 = sbr.rel (0) target = $region17
    $region16: #{combine_model_forward.5} parent=1 // pred_region
      _
    $region17: #{combine_model_forward.5} parent=1 // pred_fallthru
      _
    // Predicated region
    $region18: #{combine_model_forward.5} parent=1 // pred_check
      _
    $region19: #{combine_model_forward.5} parent=1 // pred_check_branch
      %99 = sbr.rel (0) target = $region21
    $region20: #{combine_model_forward.5} parent=1 // pred_region
      _
    $region21: #{combine_model_forward.5} parent=1 // pred_fallthru
      _
    %100 = vsyncpa [#allocation3], 1

// kernel: combine_model_forward.3
$region0: #{combine_model_forward.3}
  #allocation0 [shape = 'u32[]', space=smem, size = 0x4, offset = 0x4, fixed_abs, tag = 'smem constant byte address 0x4 - core index']
  #allocation1 [shape = 'u32[144,128]{1,0:T(1,128)}', space=vmem, size = 0x12000, scoped, tag = 'internal scratch']
  %s0 = inlined_call_operand.vmem [shape: f32[8,6,128], index: 0, kind: input, shape index: {}]
  %s1 = inlined_call_operand.vmem [shape: f32[4], index: 1, kind: input, shape index: {}]
  %s2 = inlined_call_operand.vmem [shape: f32[4,6,128], index: 2, kind: output, shape index: {0}]
  %s3 = inlined_call_operand.vmem [shape: f32[4,2,128], index: 3, kind: output, shape index: {1}]
  %4 = xla_tuple %s2, %s3
  %s5 = sld [smem:[#allocation0]]
  $region30: #{combine_model_forward.3} parent=0
    _
  %s7 = ssub.s32 1, %s5
  %s8 = scalar_select 0, %s7, %s5
  $region1: #{combine_model_forward.3} parent=0
    #allocation2 [shape = 'u8[512]{0}', space=smem, size = 0x200, scoped, tag = 'input window, operand 1, single buffered']
    #allocation3 [shape = 's32[1]{0}', space=sflag, size = 0x4, scoped, tag = 'scoped memory for combine_model_forward.3']
    %9 = vsyncpa [#allocation3], 0
    // Predicated region
    $region2: #{combine_model_forward.3} parent=1 // pred_check
      _
    $region3: #{combine_model_forward.3} parent=1 // pred_check_branch
      %11 = sbr.rel (0) target = $region5
    $region4: #{combine_model_forward.3} parent=1 // pred_region
      _
    $region5: #{combine_model_forward.3} parent=1 // pred_fallthru
      _
    // Predicated region
    $region6: #{combine_model_forward.3} parent=1 // pred_check
      _
    $region7: #{combine_model_forward.3} parent=1 // pred_check_branch
      %13 = sbr.rel (0) target = $region9
    $region8: #{combine_model_forward.3} parent=1 // pred_region
      %s15 = ssub.s32 16, 16
      %16 = vsyncadd [#allocation3], %s15
      %s18 = sshll.u32 %s1, 4
      %s19 = int_to_ptr.vmem [resolvable:$true] %s18
      %21 = dma.vmem_to_smem %s19, 16, [#allocation2], [#allocation3]
    $region9: #{combine_model_forward.3} parent=1 // pred_fallthru
      _
    // Predicated region
    $region10: #{combine_model_forward.3} parent=1 // pred_check
      _
    $region11: #{combine_model_forward.3} parent=1 // pred_check_branch
      %23 = sbr.rel (0) target = $region13
    $region12: #{combine_model_forward.3} parent=1 // pred_region
      %24 = dma.done [#allocation3], 16
    $region13: #{combine_model_forward.3} parent=1 // pred_fallthru
      _
    %25 = sfence
    %s26 = smul.u32 0, 4
    %s27 = sld [smem:[#allocation2 + %s26]]
    %v28 = vld [vmem:[%s0] sm:$0x3f]
    %v29 = vstv %s27
    %v30 = vmul.f32 %v28, %v29
    %v31 = vmax.f32 %v30, 0.0
    %v32 = vmin.f32 %v31, 1.0
    %v33 = vmul.f32 %v32, 255.0
    %v34 = vround.ne.pseudo %v33
    %v35 = vmul.f32 %v34, 0.003921569
    %36 = vst [vmem:[%s2] sm:$0x3f] %v35
    %vm37 = vcmp.eq.f32.partialorder %v34, 0.0
    %v38 = vsel %vm37, 1, 0
    %v39 = vcvt.s32.f32 %v38
    %vm40 = vcmask 1045504
    %v41 = vsel %vm40, %v39, 0.0
    %v42 = vrot.slane %v41, 4
    %v43 = vadd.f32 %v41, %v42
    %v44 = vrot.slane %v43, 2
    %v45 = vadd.f32 %v43, %v44
    %v46 = vrot.slane %v45, 1
    %v47 = vadd.f32 %v45, %v46
    %vm48 = vcmp.eq.f32.partialorder %v34, 255.0
    %v49 = vsel %vm48, 1, 0
    %v50 = vcvt.s32.f32 %v49
    %v51 = vsel %vm40, %v50, 0.0
    %v52 = vrot.slane %v51, 4
    %v53 = vadd.f32 %v51, %v52
    %v54 = vrot.slane %v53, 2
    %v55 = vadd.f32 %v53, %v54
    %v56 = vrot.slane %v55, 1
    %v57 = vadd.f32 %v55, %v56
    %vm58 = vcmask 1040384
    %v59 = vsel %vm58, %v47, %v57
    %60 = vst [vmem:[%s3] sm:$0x3] %v59
    %s61 = sadd.s32 %s26, 1
    %s62 = sld [smem:[#allocation2 + %s61]]
    %s63 = scalar_lea.vmem %s0, 8
    %v64 = vld [vmem:[%s63] sm:$0x3f]
    %v65 = vstv %s62
    %v66 = vmul.f32 %v64, %v65
    %v67 = vmax.f32 %v66, 0.0
    %v68 = vmin.f32 %v67, 1.0
    %v69 = vmul.f32 %v68, 255.0
    %v70 = vround.ne.pseudo %v69
    %v71 = vmul.f32 %v70, 0.003921569
    %s72 = scalar_lea.vmem %s2, 8
    %73 = vst [vmem:[%s72] sm:$0x3f] %v71
    %vm74 = vcmp.eq.f32.partialorder %v70, 0.0
    %v75 = vsel %vm74, 1, 0
    %v76 = vcvt.s32.f32 %v75
    %v77 = vsel %vm40, %v76, 0.0
    %v78 = vrot.slane %v77, 4
    %v79 = vadd.f32 %v77, %v78
    %v80 = vrot.slane %v79, 2
    %v81 = vadd.f32 %v79, %v80
    %v82 = vrot.slane %v81, 1
    %v83 = vadd.f32 %v81, %v82
    %vm84 = vcmp.eq.f32.partialorder %v70, 255.0
    %v85 = vsel %vm84, 1, 0
    %v86 = vcvt.s32.f32 %v85
    %v87 = vsel %vm40, %v86, 0.0
    %v88 = vrot.slane %v87, 4
    %v89 = vadd.f32 %v87, %v88
    %v90 = vrot.slane %v89, 2
    %v91 = vadd.f32 %v89, %v90
    %v92 = vrot.slane %v91, 1
    %v93 = vadd.f32 %v91, %v92
    %v94 = vsel %vm58, %v83, %v93
    %s95 = scalar_lea.vmem %s3, 2
    %96 = vst [vmem:[%s95] sm:$0x3] %v94
    %s97 = sadd.s32 %s26, 2
    %s98 = sld [smem:[#allocation2 + %s97]]
    %s99 = scalar_lea.vmem %s0, 16
    %v100 = vld [vmem:[%s99] sm:$0x3f]
    %v101 = vstv %s98
    %v102 = vmul.f32 %v100, %v101
    %v103 = vmax.f32 %v102, 0.0
    %v104 = vmin.f32 %v103, 1.0
    %v105 = vmul.f32 %v104, 255.0
    %v106 = vround.ne.pseudo %v105
    %v107 = vmul.f32 %v106, 0.003921569
    %s108 = scalar_lea.vmem %s2, 16
    %109 = vst [vmem:[%s108] sm:$0x3f] %v107
    %vm110 = vcmp.eq.f32.partialorder %v106, 0.0
    %v111 = vsel %vm110, 1, 0
    %v112 = vcvt.s32.f32 %v111
    %v113 = vsel %vm40, %v112, 0.0
    %v114 = vrot.slane %v113, 4
    %v115 = vadd.f32 %v113, %v114
    %v116 = vrot.slane %v115, 2
    %v117 = vadd.f32 %v115, %v116
    %v118 = vrot.slane %v117, 1
    %v119 = vadd.f32 %v117, %v118
    %vm120 = vcmp.eq.f32.partialorder %v106, 255.0
    %v121 = vsel %vm120, 1, 0
    %v122 = vcvt.s32.f32 %v121
    %v123 = vsel %vm40, %v122, 0.0
    %v124 = vrot.slane %v123, 4
    %v125 = vadd.f32 %v123, %v124
    %v126 = vrot.slane %v125, 2
    %v127 = vadd.f32 %v125, %v126
    %v128 = vrot.slane %v127, 1
    %v129 = vadd.f32 %v127, %v128
    %v130 = vsel %vm58, %v119, %v129
    %s131 = scalar_lea.vmem %s3, 4
    %132 = vst [vmem:[%s131] sm:$0x3] %v130
    %s133 = sadd.s32 %s26, 3
    %s134 = sld [smem:[#allocation2 + %s133]]
    %s135 = scalar_lea.vmem %s0, 24
    %v136 = vld [vmem:[%s135] sm:$0x3f]
    %v137 = vstv %s134
    %v138 = vmul.f32 %v136, %v137
    %v139 = vmax.f32 %v138, 0.0
    %v140 = vmin.f32 %v139, 1.0
    %v141 = vmul.f32 %v140, 255.0
    %v142 = vround.ne.pseudo %v141
    %v143 = vmul.f32 %v142, 0.003921569
    %s144 = scalar_lea.vmem %s2, 24
    %145 = vst [vmem:[%s144] sm:$0x3f] %v143
    %vm146 = vcmp.eq.f32.partialorder %v142, 0.0
    %v147 = vsel %vm146, 1, 0
    %v148 = vcvt.s32.f32 %v147
    %v149 = vsel %vm40, %v148, 0.0
    %v150 = vrot.slane %v149, 4
    %v151 = vadd.f32 %v149, %v150
    %v152 = vrot.slane %v151, 2
    %v153 = vadd.f32 %v151, %v152
    %v154 = vrot.slane %v153, 1
    %v155 = vadd.f32 %v153, %v154
    %vm156 = vcmp.eq.f32.partialorder %v142, 255.0
    %v157 = vsel %vm156, 1, 0
    %v158 = vcvt.s32.f32 %v157
    %v159 = vsel %vm40, %v158, 0.0
    %v160 = vrot.slane %v159, 4
    %v161 = vadd.f32 %v159, %v160
    %v162 = vrot.slane %v161, 2
    %v163 = vadd.f32 %v161, %v162
    %v164 = vrot.slane %v163, 1
    %v165 = vadd.f32 %v163, %v164
    %v166 = vsel %vm58, %v155, %v165
    %s167 = scalar_lea.vmem %s3, 6
    %168 = vst [vmem:[%s167] sm:$0x3] %v166
    // Predicated region
    $region14: #{combine_model_forward.3} parent=1 // pred_check
      _
    $region15: #{combine_model_forward.3} parent=1 // pred_check_branch
      %170 = sbr.rel (0) target = $region17
    $region16: #{combine_model_forward.3} parent=1 // pred_region
      _
    $region17: #{combine_model_forward.3} parent=1 // pred_fallthru
      _
    // Predicated region
    $region18: #{combine_model_forward.3} parent=1 // pred_check
      _
    $region19: #{combine_model_forward.3} parent=1 // pred_check_branch
      %172 = sbr.rel (0) target = $region21
    $region20: #{combine_model_forward.3} parent=1 // pred_region
      _
    $region21: #{combine_model_forward.3} parent=1 // pred_fallthru
      _
    // Predicated region
    $region22: #{combine_model_forward.3} parent=1 // pred_check
      _
    $region23: #{combine_model_forward.3} parent=1 // pred_check_branch
      %174 = sbr.rel (0) target = $region25
    $region24: #{combine_model_forward.3} parent=1 // pred_region
      _
    $region25: #{combine_model_forward.3} parent=1 // pred_fallthru
      _
    // Predicated region
    $region26: #{combine_model_forward.3} parent=1 // pred_check
      _
    $region27: #{combine_model_forward.3} parent=1 // pred_check_branch
      %176 = sbr.rel (0) target = $region29
    $region28: #{combine_model_forward.3} parent=1 // pred_region
      _
    $region29: #{combine_model_forward.3} parent=1 // pred_fallthru
      _
    %177 = vsyncpa [#allocation3], 1

</llo_original>
